<compile_context>
chip_gen: v6e
topology: v6e:2x2x1
jax: 0.10.0
libtpu: 0.0.40
codegen_flags: <defaults>
</compile_context>

<pallas_src>
import jax
import jax.numpy as jnp
from jax.experimental import pallas as pl
from jax.experimental.pallas import tpu as pltpu


def _round_up(a, b):
    return ((a + b - 1) // b) * b


def _vmem_limit_bytes():
    """Scoped-VMEM limit derived from the actual chip (conservative fallback)."""
    cap = 64 * 1024 * 1024  # fallback = smallest physical VMEM per core (v7x)
    try:
        info = pltpu.get_tpu_info()
        cap = int(getattr(info, "vmem_capacity_bytes", cap))
    except Exception:
        pass
    # Leave headroom for compiler-internal scratch; never ask for more than 96 MiB.
    return min((cap * 3) // 4, 96 * 1024 * 1024)


# ------------------------------ kernels -------------------------------------

def _proj_kernel(w_ref, x_ref, b_ref, o_ref):
    # Resident-weight path (K fits in one block): no accumulator scratch and no
    # pl.when -- one MXU GEMM, one bias add + cast, one lane-dense store.
    # w_ref: (E, K) | x_ref: (1, K, tm) | b_ref: (E, 1) f32 | o_ref: (1, E, tm)
    o_ref[0, :, :] = (
        jnp.dot(w_ref[...], x_ref[0, :, :], preferred_element_type=jnp.float32)
        + b_ref[...]
    ).astype(o_ref.dtype)


def _proj_kernel_ktiled(w_ref, x_ref, b_ref, o_ref, acc_ref):
    # K-tiled path: f32 VMEM accumulator, k is the innermost ("arbitrary") axis.
    # w_ref: (E, tk) | x_ref: (1, tk, tm) | b_ref: (E, 1) | acc_ref: (E, tm) f32
    k = pl.program_id(2)

    @pl.when(k == 0)
    def _init():
        acc_ref[...] = jnp.zeros_like(acc_ref)

    acc_ref[...] += jnp.dot(
        w_ref[...], x_ref[0, :, :], preferred_element_type=jnp.float32
    )

    @pl.when(k == pl.num_programs(2) - 1)
    def _finalize():
        o_ref[0, :, :] = (acc_ref[...] + b_ref[...]).astype(o_ref.dtype)


# ------------------------------ wrapper -------------------------------------

def patch_embed_forward(x, weight, bias, patch_size, *, compute_dtype=jnp.bfloat16):
    """x: (B, C, D, H, W); weight: (E, C, pd, ph, pw); bias: (E,).
    Returns (B, E, D//pd, H//ph, W//pw), matching PyTorch Conv3d with
    kernel_size=stride=patch_size, padding=0.

    compute_dtype: dtype the GEMM operands are cast to (bf16 by default, f32
    accumulation on the MXU). Pass jnp.float32 for strict f32-conv parity.
    """
    B, C, D, H, W = x.shape
    E = weight.shape[0]
    pd, ph, pw = patch_size
    # NOTE: PyTorch Conv3d floors the output size for non-divisible inputs; we
    # require divisibility (the standard PatchEmbed usage).
    assert D % pd == 0 and H % ph == 0 and W % pw == 0, \
        "spatial dims must be divisible by patch_size"
    nd, nh, nw = D // pd, H // ph, W // pw
    n_patches = nd * nh * nw
    K = C * pd * ph * pw
    out_dtype = x.dtype
    out_isz = jnp.dtype(out_dtype).itemsize
    cd_isz = jnp.dtype(compute_dtype).itemsize

    # ---- glue: K-major patch matrix (patches on lanes), in compute dtype ----
    # xk[b, (c,di,dj,dk), (i,j,k)] = x[b, c, i*pd+di, j*ph+dj, k*pw+dk]
    xk = x.astype(compute_dtype)
    xk = xk.reshape(B, C, nd, pd, nh, ph, nw, pw)
    xk = xk.transpose(0, 1, 3, 5, 7, 2, 4, 6)      # (B, C, pd, ph, pw, nd, nh, nw)
    xk = xk.reshape(B, K, n_patches)
    wm = weight.reshape(E, K).astype(compute_dtype)  # flatten order matches xk
    bm = bias.astype(jnp.float32).reshape(E, 1)

    # ---- tiling: pick tm first, then a VMEM-budget-driven tk ----------------
    vmem_limit = _vmem_limit_bytes()
    budget = (vmem_limit * 4) // 5

    MAX_TM = 512
    if n_patches <= MAX_TM:
        tm = n_patches                 # single tile; block == full patch axis
    else:
        # tm must be a multiple of 128. Pick the candidate wasting the least
        # padded/masked work, preferring the larger tile on ties (128-wide
        # tiles reach only ~29% of HBM roofline vs ~85% at 512 on v6e).
        best = None
        for cand in (512, 384, 256):
            key = ((-n_patches) % cand, -cand)
            if best is None or key < best[0]:
                best = (key, cand)
        tm = best[1]
    m_tiles = pl.cdiv(n_patches, tm)
    cols = m_tiles * tm                # padded patch columns fed to the kernel

    def footprint(tk, tiled):
        f = 2 * E * tk * cd_isz        # weight blocks (double-buffered)
        f += 2 * tk * tm * cd_isz      # patch-matrix blocks
        f += 2 * E * tm * out_isz      # output blocks
        f += 2 * E * 4                 # bias
        if tiled:
            f += E * tm * 4            # f32 accumulator scratch
        return f

    if footprint(K, False) <= budget:
        tk, k_pad, k_tiled = K, K, False        # weight stays resident in VMEM
    else:
        k_tiled = True
        tk = 128
        for cand in (4096, 2048, 1024, 512, 256, 128):
            if footprint(cand, True) <= budget:
                tk = cand
                break
        k_pad = _round_up(K, tk)

    # Zero-pad the inputs so every kernel read is in bounds (padded K rows /
    # patch columns contribute zero to the GEMM).  The pads fuse with the
    # re-layout above.  The OUTPUT stays unpadded -> no post-kernel crop copy;
    # Pallas masks the final partial output tile's store.
    if cols != n_patches or k_pad != K:
        xk = jnp.pad(xk, ((0, 0), (0, k_pad - K), (0, cols - n_patches)))
    if k_pad != K:
        wm = jnp.pad(wm, ((0, 0), (0, k_pad - K)))

    cost = pl.CostEstimate(
        flops=2 * B * E * K * n_patches,
        transcendentals=0,
        bytes_accessed=int(xk.size) * cd_isz
        + int(wm.size) * cd_isz
        + E * 4
        + B * E * n_patches * out_isz,
    )

    out_shape = jax.ShapeDtypeStruct((B, E, n_patches), out_dtype)

    if not k_tiled:
        # Resident-weight path: weight/bias block indices are constant, so the
        # pipeline DMAs them once; no accumulator scratch is needed.
        out = pl.pallas_call(
            _proj_kernel,
            out_shape=out_shape,
            grid_spec=pltpu.PrefetchScalarGridSpec(
                num_scalar_prefetch=0,
                grid=(B, m_tiles),
                in_specs=[
                    pl.BlockSpec((E, tk), lambda b, m: (0, 0)),        # weight
                    pl.BlockSpec((1, tk, tm), lambda b, m: (b, 0, m)),  # patches
                    pl.BlockSpec((E, 1), lambda b, m: (0, 0)),         # bias
                ],
                out_specs=pl.BlockSpec((1, E, tm), lambda b, m: (b, 0, m)),
            ),
            compiler_params=pltpu.CompilerParams(
                dimension_semantics=("parallel", "parallel"),
                vmem_limit_bytes=vmem_limit,
                allow_input_fusion=[False, True, False],
            ),
            cost_estimate=cost,
        )(wm, xk, bm)
    else:
        out = pl.pallas_call(
            _proj_kernel_ktiled,
            out_shape=out_shape,
            grid_spec=pltpu.PrefetchScalarGridSpec(
                num_scalar_prefetch=0,
                grid=(B, m_tiles, k_pad // tk),
                in_specs=[
                    pl.BlockSpec((E, tk), lambda b, m, k: (0, k)),         # weight
                    pl.BlockSpec((1, tk, tm), lambda b, m, k: (b, k, m)),  # patches
                    pl.BlockSpec((E, 1), lambda b, m, k: (0, 0)),          # bias
                ],
                out_specs=pl.BlockSpec((1, E, tm), lambda b, m, k: (b, 0, m)),
                scratch_shapes=[pltpu.VMEM((E, tm), jnp.float32)],
            ),
            compiler_params=pltpu.CompilerParams(
                dimension_semantics=("parallel", "parallel", "arbitrary"),
                vmem_limit_bytes=vmem_limit,
                allow_input_fusion=[False, True, False],
            ),
            cost_estimate=cost,
        )(wm, xk, bm)

    # Free reshape (no transpose, no crop): output is already channels-major.
    return out.reshape(B, E, nd, nh, nw)


def reference_conv(x, weight, bias, patch_size):
    # Pure-JAX f32 reference: strided 3D conv (NCDHW / OIDHW), padding VALID.
    y = jax.lax.conv_general_dilated(
        x, weight, window_strides=patch_size, padding="VALID",
        dimension_numbers=("NCDHW", "OIDHW", "NCDHW"))
    return y + bias.reshape(1, -1, 1, 1, 1)


if __name__ == "__main__":
    key = jax.random.PRNGKey(0)
    kx, kw, kb = jax.random.split(key, 3)

    # Small shapes consistent with a 3D PatchEmbed:
    B, C = 2, 4
    D = H = W = 16
    patch_size = (4, 4, 4)
    embed_dim = 32

    x = jax.random.normal(kx, (B, C, D, H, W), dtype=jnp.float32)
    # Deterministic synthetic parameters (shapes match nn.Conv3d(C, E, patch, patch, 0)).
    weight = jax.random.normal(kw, (embed_dim, C) + patch_size, dtype=jnp.float32) * 0.05
    bias = jax.random.normal(kb, (embed_dim,), dtype=jnp.float32) * 0.05

    out = patch_embed_forward(x, weight, bias, patch_size)
    out = jax.block_until_ready(out)

    ref = reference_conv(x, weight, bias, patch_size)
    assert out.shape == (B, embed_dim, D // 4, H // 4, W // 4), out.shape
    # bf16 operands with f32 MXU accumulation -> looser tolerance vs f32 conv.
    assert jnp.allclose(out, ref, atol=5e-2, rtol=5e-2), "mismatch vs conv reference"

    print("KERNEL_OK")
</pallas_src>

<mosaic_0001>
module attributes {stable_mosaic.version = 11 : i64} {
  func.func @_proj_kernel(%arg0: i32, %arg1: i32, %arg2: memref<32x256xbf16, #tpu.memory_space<vmem>>, %arg3: memref<1x256x64xbf16, #tpu.memory_space<vmem>>, %arg4: memref<32x1xf32, #tpu.memory_space<vmem>>, %arg5: memref<1x32x64xf32, #tpu.memory_space<vmem>>) attributes {dimension_semantics = [#tpu.dimension_semantics<parallel>, #tpu.dimension_semantics<parallel>], iteration_bounds = array<i64: 2, 1>, scalar_prefetch = 0 : i64, scratch_operands = 0 : i64, tpu.core_type = #tpu.core_type<tc>, window_params = [{pipeline_mode = #tpu.pipeline_mode<synchronous>, transform_indices = @transform_0, window_bounds = array<i64: 32, 256>}, {transform_indices = @transform_1, window_bounds = array<i64: 1, 256, 64>}, {pipeline_mode = #tpu.pipeline_mode<synchronous>, transform_indices = @transform_2, window_bounds = array<i64: 32, 1>}, {transform_indices = @transform_3, window_bounds = array<i64: 1, 32, 64>}]} {
    %c0 = arith.constant 0 : index
    %c0_0 = arith.constant 0 : index
    %0 = vector.load %arg2[%c0, %c0_0] : memref<32x256xbf16, #tpu.memory_space<vmem>>, vector<32x256xbf16>
    %c0_1 = arith.constant 0 : index
    %c0_2 = arith.constant 0 : index
    %c0_3 = arith.constant 0 : index
    %1 = vector.load %arg3[%c0_1, %c0_2, %c0_3] : memref<1x256x64xbf16, #tpu.memory_space<vmem>>, vector<1x256x64xbf16>
    %2 = vector.shape_cast %1 : vector<1x256x64xbf16> to vector<256x64xbf16>
    %cst = arith.constant dense<0.000000e+00> : vector<32x64xf32>
    %3 = tpu.matmul %0, %2, %cst {dimension_numbers = #tpu.dot_dimension_numbers<[1], [0], [0], [1], [0, 0, 1, 1], [], []>} : vector<32x256xbf16>, vector<256x64xbf16>, vector<32x64xf32> -> vector<32x64xf32>
    %c0_4 = arith.constant 0 : index
    %c0_5 = arith.constant 0 : index
    %4 = vector.load %arg4[%c0_4, %c0_5] : memref<32x1xf32, #tpu.memory_space<vmem>>, vector<32x1xf32>
    %5 = vector.broadcast %4 : vector<32x1xf32> to vector<32x64xf32>
    %6 = arith.addf %3, %5 : vector<32x64xf32>
    %c0_6 = arith.constant 0 : index
    %c0_7 = arith.constant 0 : index
    %c0_8 = arith.constant 0 : index
    %7 = vector.load %arg5[%c0_6, %c0_7, %c0_8] : memref<1x32x64xf32, #tpu.memory_space<vmem>>, vector<1x32x64xf32>
    %8 = vector.shape_cast %7 : vector<1x32x64xf32> to vector<32x64xf32>
    %9 = vector.shape_cast %6 : vector<32x64xf32> to vector<1x32x64xf32>
    tpu.vector_store %arg5[%c0_6, %c0_7, %c0_8], %9 {strides = array<i32>} : memref<1x32x64xf32, #tpu.memory_space<vmem>>, vector<1x32x64xf32>,
    return
  }
  func.func @transform_0(%arg0: i32, %arg1: i32) -> (i32, i32) {
    %c0_i32 = arith.constant 0 : i32
    %c0_i32_0 = arith.constant 0 : i32
    %c0_i32_1 = arith.constant 0 : i32
    return %c0_i32, %c0_i32_0 : i32, i32
  }
  func.func @transform_1(%arg0: i32, %arg1: i32) -> (i32, i32, i32) {
    %c0_i32 = arith.constant 0 : i32
    %c0_i32_0 = arith.constant 0 : i32
    return %arg0, %c0_i32, %arg1 : i32, i32, i32
  }
  func.func @transform_2(%arg0: i32, %arg1: i32) -> (i32, i32) {
    %c0_i32 = arith.constant 0 : i32
    %c0_i32_0 = arith.constant 0 : i32
    %c0_i32_1 = arith.constant 0 : i32
    return %c0_i32, %c0_i32_0 : i32, i32
  }
  func.func @transform_3(%arg0: i32, %arg1: i32) -> (i32, i32, i32) {
    %c0_i32 = arith.constant 0 : i32
    %c0_i32_0 = arith.constant 0 : i32
    return %arg0, %c0_i32, %arg1 : i32, i32, i32
  }
}

</mosaic_0001>

<llo_original>
// kernel: tpu_custom_call.1
$region0: #{tpu_custom_call.1}
  #allocation0 [shape = 'u32[]', space=smem, size = 0x4, offset = 0x4, fixed_abs, tag = 'smem constant byte address 0x4 - core index']
  #allocation1 [shape = 'u32[144,128]{1,0:T(1,128)}', space=vmem, size = 0x12000, scoped, tag = 'internal scratch']
  %s0 = inlined_call_operand.vmem [shape: bf16[32,256], index: 0, kind: input, shape index: {}]
  %s1 = inlined_call_operand.vmem [shape: bf16[2,256,64], index: 1, kind: input, shape index: {}]
  %s2 = inlined_call_operand.vmem [shape: f32[32,1], index: 2, kind: input, shape index: {}]
  %s3 = inlined_call_operand.hbm [shape: f32[2,32,64], index: 3, kind: output, shape index: {}]
  %s4 = sld [smem:[#allocation0]]
  $region45: #{tpu_custom_call.1} parent=0
    _
  %s6 = ssub.s32 1, %s4
  %s7 = scalar_select 0, %s6, %s4
  $region1: #{tpu_custom_call.1} parent=0
    #allocation2 [shape = 'u8[32768]{0}', space=vmem, size = 0x8000, scoped, tag = 'output window, operand 0']
    #allocation3 [shape = 's32[2]{0}', space=sflag, size = 0x8, scoped, tag = 'scoped memory for tpu_custom_call.1']
    %8 = vsyncpa [#allocation3], 0
    %s9 = scalar_lea.sflag [#allocation3], 1
    %10 = vsyncpa %s9, 0
    loop: start=0, step=1, limit=4
    $region2: #{tpu_custom_call.1} parent=1 // loop_pre_header
      _
    $region3: #{tpu_custom_call.1} parent=1 // loop_header
      %s12 = sphi 0, %s16
      %p13 = scmp.ge.s32.totalorder %s12, 4
      %s19 = sphi 0, %s31
      %s20 = sphi 0, %s27
      %s21 = sphi 0, %s19
      %s22 = sphi 0, %s20
      %s23 = sphi 0, %s21
      %s24 = sphi 0, %s22
      %s32 = sphi 0, %s32
      %s34 = sphi 0, %s32
      %s35 = sphi 0, %s34
      %s49 = sphi 0, %s35
      %s57 = sphi 0, %s59
      %s60 = sphi 0, %s57
      %s61 = sphi 0, %s60
      %s77 = sphi 0, %s61
      %s81 = sphi 0, %s81
      %s83 = sphi 0, %s81
      %s84 = sphi 0, %s83
      %s98 = sphi 0, %s84
      %s106 = sphi 0, %s108
      %s109 = sphi 0, %s106
      %s110 = sphi 0, %s109
      %s126 = sphi 0, %s110
    $region4: #{tpu_custom_call.1} parent=1 // loop_header_branch
      %15 = sbr.rel (%p13) target = $region8
    $region5: #{tpu_custom_call.1} parent=1 // loop_body
      %s17 = ssub.s32 %s12, 1
      %s18 = ssub.s32 %s12, 2
      %s25 = sadd.s32 1, %s20
      %p26 = scmp.ge.s32.totalorder %s25, 1
      %s27 = scalar_select %p26, 0, %s25
      %s28 = sadd.s32 1, %s19
      %s29 = scalar_select %p26, %s28, %s19
      %p30 = scmp.ge.s32.totalorder %s29, 2
      %s31 = scalar_select %p30, 0, %s29
      %s33 = sadd.s32 %s32, 1
      %p36 = scmp.eq.s32.totalorder %s12, 1
      %p37 = scmp.ne.s32.totalorder %s32, %s34
      %p38 = scmp.eq.s32.totalorder %s12, 0
      %p39 = por %p37, %p38
      %p40 = scmp.ne.s32.totalorder %s32, %s34
      %p41 = scmp.eq.s32.totalorder %s17, 1
      %p42 = por %p40, %p41
      %p43 = scmp.ne.s32.totalorder %s34, %s35
      %p44 = scmp.eq.s32.totalorder %s17, 0
      %p45 = por %p43, %p44
      %p46 = scmp.ne.s32.totalorder %s34, %s35
      %p47 = scmp.eq.s32.totalorder %s18, 1
      %p48 = por %p46, %p47
      %p50 = scmp.ne.s32.totalorder %s35, %s49
      %p51 = scmp.eq.s32.totalorder %s18, 0
      %p52 = por %p50, %p51
      %s53 = ssub.s32 %s19, %s31
      %s54 = ssub.s32 %s20, %s27
      %s55 = sor.u32 %s53, %s54
      %p56 = scmp.eq.s32.totalorder %s55, 0
      %s58 = sadd.s32 %s57, 1
      %s59 = scalar_select %p56, %s57, %s58
      %p62 = pneg %p56
      %p63 = scmp.eq.s32.totalorder %s12, 1
      %p64 = por %p62, %p63
      %p65 = scmp.ne.s32.totalorder %s57, %s60
      %p66 = scmp.eq.s32.totalorder %s12, 0
      %p67 = por %p65, %p66
      %p68 = scmp.ne.s32.totalorder %s57, %s60
      %p69 = scmp.eq.s32.totalorder %s17, 1
      %p70 = por %p68, %p69
      %p71 = scmp.ne.s32.totalorder %s60, %s61
      %p72 = scmp.eq.s32.totalorder %s17, 0
      %p73 = por %p71, %p72
      %p74 = scmp.ne.s32.totalorder %s60, %s61
      %p75 = scmp.eq.s32.totalorder %s18, 1
      %p76 = por %p74, %p75
      %p78 = scmp.ne.s32.totalorder %s61, %s77
      %p79 = scmp.eq.s32.totalorder %s18, 0
      %p80 = por %p78, %p79
      %s82 = sadd.s32 %s81, 1
      %p85 = scmp.eq.s32.totalorder %s12, 1
      %p86 = scmp.ne.s32.totalorder %s81, %s83
      %p87 = scmp.eq.s32.totalorder %s12, 0
      %p88 = por %p86, %p87
      %p89 = scmp.ne.s32.totalorder %s81, %s83
      %p90 = scmp.eq.s32.totalorder %s17, 1
      %p91 = por %p89, %p90
      %p92 = scmp.ne.s32.totalorder %s83, %s84
      %p93 = scmp.eq.s32.totalorder %s17, 0
      %p94 = por %p92, %p93
      %p95 = scmp.ne.s32.totalorder %s83, %s84
      %p96 = scmp.eq.s32.totalorder %s18, 1
      %p97 = por %p95, %p96
      %p99 = scmp.ne.s32.totalorder %s84, %s98
      %p100 = scmp.eq.s32.totalorder %s18, 0
      %p101 = por %p99, %p100
      %s102 = ssub.s32 %s19, %s31
      %s103 = ssub.s32 %s20, %s27
      %s104 = sor.u32 %s102, %s103
      %p105 = scmp.eq.s32.totalorder %s104, 0
      %s107 = sadd.s32 %s106, 1
      %s108 = scalar_select %p105, %s106, %s107
      %p111 = pneg %p105
      %p112 = scmp.eq.s32.totalorder %s12, 1
      %p113 = por %p111, %p112
      %p114 = scmp.ne.s32.totalorder %s106, %s109
      %p115 = scmp.eq.s32.totalorder %s12, 0
      %p116 = por %p114, %p115
      %p117 = scmp.ne.s32.totalorder %s106, %s109
      %p118 = scmp.eq.s32.totalorder %s17, 1
      %p119 = por %p117, %p118
      %p120 = scmp.ne.s32.totalorder %s109, %s110
      %p121 = scmp.eq.s32.totalorder %s17, 0
      %p122 = por %p120, %p121
      %p123 = scmp.ne.s32.totalorder %s109, %s110
      %p124 = scmp.eq.s32.totalorder %s18, 1
      %p125 = por %p123, %p124
      %p127 = scmp.ne.s32.totalorder %s110, %s126
      %p128 = scmp.eq.s32.totalorder %s18, 0
      %p129 = por %p127, %p128
      %p130 = scmp.le.s32.totalorder 1, %s12
      %p131 = scmp.lt.s32.totalorder %s12, 3
      %p132 = pnand %p130, %p131
      %p133 = pneg %p132
      // Predicated region
      $region9: #{tpu_custom_call.1} parent=5 // pred_check
        _
      $region10: #{tpu_custom_call.1} parent=5 // pred_check_branch
        %135 = sbr.rel (%p132) target = $region12
      $region11: #{tpu_custom_call.1} parent=5 // pred_region
        %s136 = ssub.s32 %s12, 1
        // Predicated region
        $region13: #{tpu_custom_call.1} parent=11 // pred_check
          %p137 = pneg %p45
        $region14: #{tpu_custom_call.1} parent=11 // pred_check_branch
          %139 = sbr.rel (%p137) target = $region16
        $region15: #{tpu_custom_call.1} parent=11 // pred_region
          _
        $region16: #{tpu_custom_call.1} parent=11 // pred_fallthru
          _
        // Predicated region
        $region17: #{tpu_custom_call.1} parent=11 // pred_check
          %p140 = pneg %p94
        $region18: #{tpu_custom_call.1} parent=11 // pred_check_branch
          %142 = sbr.rel (%p140) target = $region20
        $region19: #{tpu_custom_call.1} parent=11 // pred_region
          _
        $region20: #{tpu_custom_call.1} parent=11 // pred_fallthru
          _
      $region12: #{tpu_custom_call.1} parent=5 // pred_fallthru
        _
      %p143 = scmp.lt.s32.totalorder %s12, 2
      // Predicated region
      $region21: #{tpu_custom_call.1} parent=5 // pred_check
        %p144 = pneg %p143
      $region22: #{tpu_custom_call.1} parent=5 // pred_check_branch
        %146 = sbr.rel (%p144) target = $region24
      $region23: #{tpu_custom_call.1} parent=5 // pred_region
        // Predicated region
        $region25: #{tpu_custom_call.1} parent=23 // pred_check
          %p147 = pneg %p67
        $region26: #{tpu_custom_call.1} parent=23 // pred_check_branch
          %149 = sbr.rel (%p147) target = $region28
        $region27: #{tpu_custom_call.1} parent=23 // pred_region
          %p150 = scmp.lt.s32.totalorder %s19, 1
          %s151 = scalar_select %p150, %s19, 1
          %p152 = scmp.lt.s32.totalorder %s20, 0
          %s153 = scalar_select %p152, %s20, 0
          %s154 = smul.addr %s151, 32
          %s155 = sadd.s32 %s153, %s154
          %s156 = smul.addr %s155, 4
          %s157 = scalar_lea.vmem %s1, %s156
        $region28: #{tpu_custom_call.1} parent=23 // pred_fallthru
          _
      $region24: #{tpu_custom_call.1} parent=5 // pred_fallthru
        _
      %p158 = scmp.le.s32.totalorder 1, %s12
      %p159 = scmp.lt.s32.totalorder %s12, 3
      %p160 = pnand %p158, %p159
      %p161 = pneg %p160
      // Predicated region
      $region29: #{tpu_custom_call.1} parent=5 // pred_check
        _
      $region30: #{tpu_custom_call.1} parent=5 // pred_check_branch
        %163 = sbr.rel (%p160) target = $region32
      $region31: #{tpu_custom_call.1} parent=5 // pred_region
        %s164 = ssub.s32 %s12, 1
        %p165 = pneg %p45
        %p166 = pneg %p42
        %p167 = scmp.lt.s32.totalorder %s21, 1
        %s168 = scalar_select %p167, %s21, 1
        %p169 = scmp.lt.s32.totalorder %s22, 0
        %s170 = scalar_select %p169, %s22, 0
        %s171 = smul.addr %s168, 32
        %s172 = sadd.s32 %s170, %s171
        %s173 = smul.addr %s172, 4
        %s174 = scalar_lea.vmem %s1, %s173
        %p175 = pneg %p73
        %p176 = pneg %p70
        %p177 = pneg %p94
        %p178 = pneg %p91
        %p179 = pneg %p122
        %p180 = pneg %p119
        %s181 = sand.u32 %s109, 1
        %s182 = scalar_lea.sflag [#allocation3], %s181
        %s183 = sand.u32 %s109, 1
        %s184 = smul.addr %s183, 32
        %s185 = scalar_lea.vmem [#allocation2], %s184
        %p186 = scmp.lt.s32.totalorder %s21, 1
        %s187 = scalar_select %p186, %s21, 1
        %p188 = scmp.lt.s32.totalorder %s22, 0
        %s189 = scalar_select %p188, %s22, 0
        %s190 = smul.addr %s187, 32
        %s191 = sadd.s32 %s189, %s190
        %s192 = smul.addr %s191, 4
        %s193 = scalar_lea.vmem %s1, %s192
        %v195 = vld [vmem:[%s0] sm:$0xff]
        %v196 = vld [vmem:[%s0 + $0x8] sm:$0xff]
        %v197 = vld [vmem:[%s0 + $0x10] sm:$0xff]
        %v198 = vld [vmem:[%s0 + $0x18] sm:$0xff]
        %v199 = vld [vmem:[%s193] sm:$0xf]
        %v200 = vld [vmem:[%s193 + $0x4] sm:$0xf]
        %v201 = vld [vmem:[%s193 + $0x8] sm:$0xf]
        %v202 = vld [vmem:[%s193 + $0xc] sm:$0xf]
        %v203 = vld [vmem:[%s193 + $0x10] sm:$0xf]
        %v204 = vld [vmem:[%s193 + $0x14] sm:$0xf]
        %v205 = vld [vmem:[%s193 + $0x18] sm:$0xf]
        %v206 = vld [vmem:[%s193 + $0x1c] sm:$0xf]
        %v207 = vld [vmem:[%s193 + $0x20] sm:$0xf]
        %v208 = vld [vmem:[%s193 + $0x24] sm:$0xf]
        %v209 = vld [vmem:[%s193 + $0x28] sm:$0xf]
        %v210 = vld [vmem:[%s193 + $0x2c] sm:$0xf]
        %v211 = vld [vmem:[%s193 + $0x30] sm:$0xf]
        %v212 = vld [vmem:[%s193 + $0x34] sm:$0xf]
        %v213 = vld [vmem:[%s193 + $0x38] sm:$0xf]
        %v214 = vld [vmem:[%s193 + $0x3c] sm:$0xf]
        %v215 = vld [vmem:[%s193 + $0x40] sm:$0xf]
        %v216 = vld [vmem:[%s193 + $0x44] sm:$0xf]
        %v217 = vld [vmem:[%s193 + $0x48] sm:$0xf]
        %v218 = vld [vmem:[%s193 + $0x4c] sm:$0xf]
        %v219 = vld [vmem:[%s193 + $0x50] sm:$0xf]
        %v220 = vld [vmem:[%s193 + $0x54] sm:$0xf]
        %v221 = vld [vmem:[%s193 + $0x58] sm:$0xf]
        %v222 = vld [vmem:[%s193 + $0x5c] sm:$0xf]
        %v223 = vld [vmem:[%s193 + $0x60] sm:$0xf]
        %v224 = vld [vmem:[%s193 + $0x64] sm:$0xf]
        %v225 = vld [vmem:[%s193 + $0x68] sm:$0xf]
        %v226 = vld [vmem:[%s193 + $0x6c] sm:$0xf]
        %v227 = vld [vmem:[%s193 + $0x70] sm:$0xf]
        %v228 = vld [vmem:[%s193 + $0x74] sm:$0xf]
        %v229 = vld [vmem:[%s193 + $0x78] sm:$0xf]
        %v230 = vld [vmem:[%s193 + $0x7c] sm:$0xf]
        %v231 = vld [vmem:[%s2] sm:$0xff]
        %v232 = vld [vmem:[%s2 + $0x8] sm:$0xff]
        %v233 = vld [vmem:[%s2 + $0x10] sm:$0xff]
        %v234 = vld [vmem:[%s2 + $0x18] sm:$0xff]
        %236 = vset.pattern.permute.xlu0 0
        %237 = vperm.xlu0 %236, %v231
        %v238 = vpop.permute.xlu0 %237
        %241 = vset.pattern.permute.xlu0 0
        %242 = vperm.xlu0 %241, %v232
        %v243 = vpop.permute.xlu0 %242
        %246 = vset.pattern.permute.xlu0 0
        %247 = vperm.xlu0 %246, %v233
        %v248 = vpop.permute.xlu0 %247
        %251 = vset.pattern.permute.xlu0 0
        %252 = vperm.xlu0 %251, %v234
        %v253 = vpop.permute.xlu0 %252
        %v259 = vunpack.c.l.b16 %v195
        %v260 = vunpack.c.h.b16 %v195
        %v261 = vunpack.c.l.b16 %v196
        %v262 = vunpack.c.h.b16 %v196
        %v263 = vunpack.c.l.b16 %v197
        %v264 = vunpack.c.h.b16 %v197
        %v265 = vunpack.c.l.b16 %v198
        %v266 = vunpack.c.h.b16 %v198
        %v267 = vpack.c.b16 %v261, %v259
        %v268 = vpack.c.b16 %v262, %v260
        %v269 = vpack.c.b16 %v265, %v263
        %v270 = vpack.c.b16 %v266, %v264
        %v307 = vunpack.c.l.b16 %v199
        %v308 = vunpack.c.l.b16 %v200
        %v309 = vunpack.c.l.b16 %v201
        %v310 = vunpack.c.l.b16 %v202
        %v311 = vunpack.c.l.b16 %v203
        %v312 = vunpack.c.l.b16 %v204
        %v313 = vunpack.c.l.b16 %v205
        %v314 = vunpack.c.l.b16 %v206
        %v315 = vunpack.c.l.b16 %v207
        %v316 = vunpack.c.l.b16 %v208
        %v317 = vunpack.c.l.b16 %v209
        %v318 = vunpack.c.l.b16 %v210
        %v319 = vunpack.c.l.b16 %v211
        %v320 = vunpack.c.l.b16 %v212
        %v321 = vunpack.c.l.b16 %v213
        %v322 = vunpack.c.l.b16 %v214
        %v323 = vunpack.c.l.b16 %v215
        %v324 = vunpack.c.l.b16 %v216
        %v325 = vunpack.c.l.b16 %v217
        %v326 = vunpack.c.l.b16 %v218
        %v327 = vunpack.c.l.b16 %v219
        %v328 = vunpack.c.l.b16 %v220
        %v329 = vunpack.c.l.b16 %v221
        %v330 = vunpack.c.l.b16 %v222
        %v331 = vunpack.c.l.b16 %v223
        %v332 = vunpack.c.l.b16 %v224
        %v333 = vunpack.c.l.b16 %v225
        %v334 = vunpack.c.l.b16 %v226
        %v335 = vunpack.c.l.b16 %v227
        %v336 = vunpack.c.l.b16 %v228
        %v337 = vunpack.c.l.b16 %v229
        %v338 = vunpack.c.l.b16 %v230
        %v339 = vpack.c.b16 %v308, %v307
        %v340 = vpack.c.b16 %v310, %v309
        %v341 = vpack.c.b16 %v312, %v311
        %v342 = vpack.c.b16 %v314, %v313
        %v343 = vpack.c.b16 %v316, %v315
        %v344 = vpack.c.b16 %v318, %v317
        %v345 = vpack.c.b16 %v320, %v319
        %v346 = vpack.c.b16 %v322, %v321
        %v347 = vpack.c.b16 %v324, %v323
        %v348 = vpack.c.b16 %v326, %v325
        %v349 = vpack.c.b16 %v328, %v327
        %v350 = vpack.c.b16 %v330, %v329
        %v351 = vpack.c.b16 %v332, %v331
        %v352 = vpack.c.b16 %v334, %v333
        %v353 = vpack.c.b16 %v336, %v335
        %v354 = vpack.c.b16 %v338, %v337
        %371 = vmatprep.subr.bf16.mxu0 0
        %372 = vmatpush1.bf16.msra.mxu0 %v346
        %373 = vmatprep.subr.bf16.mxu0 0
        %374 = vmatpush1.bf16.msra.mxu0 %v345
        %375 = vmatprep.subr.bf16.mxu0 0
        %376 = vmatpush1.bf16.msra.mxu0 %v344
        %377 = vmatprep.subr.bf16.mxu0 0
        %378 = vmatpush1.bf16.msra.mxu0 %v343
        %379 = vmatprep.subr.bf16.mxu0 0
        %380 = vmatpush1.bf16.msra.mxu0 %v342
        %381 = vmatprep.subr.bf16.mxu0 0
        %382 = vmatpush1.bf16.msra.mxu0 %v341
        %383 = vmatprep.subr.bf16.mxu0 0
        %384 = vmatpush1.bf16.msra.mxu0 %v340
        %385 = vmatprep.subr.bf16.mxu0 0
        %386 = vmatpush1.bf16.msra.mxu0 %v339
        %387 = vmatprep.subr.bf16.mxu0 0
        %388 = vmatpush2.bf16.msra.mxu0 %v354
        %389 = vmatprep.subr.bf16.mxu0 0
        %390 = vmatpush2.bf16.msra.mxu0 %v353
        %391 = vmatprep.subr.bf16.mxu0 0
        %392 = vmatpush2.bf16.msra.mxu0 %v352
        %393 = vmatprep.subr.bf16.mxu0 0
        %394 = vmatpush2.bf16.msra.mxu0 %v351
        %395 = vmatprep.subr.bf16.mxu0 0
        %396 = vmatpush2.bf16.msra.mxu0 %v350
        %397 = vmatprep.subr.bf16.mxu0 0
        %398 = vmatpush2.bf16.msra.mxu0 %v349
        %399 = vmatprep.subr.bf16.mxu0 0
        %400 = vmatpush2.bf16.msra.mxu0 %v348
        %401 = vmatprep.subr.bf16.mxu0 0
        %402 = vmatpush2.bf16.msra.mxu0 %v347
        %403 = vmatprep.mubr.bf16.mxu0 %v268
        %404 = vmatmul.mubr.bf16.gmra.mxu0 %v267
        %v405 = vpop.f32.mrf.mxu0
        %v406 = vadd.f32 %v238, %v405
        %v407 = vpop.f32.mrf.mxu0
        %v408 = vpop.f32.mrf.mxu0
        %v409 = vadd.f32 %v243, %v408
        %v410 = vpop.f32.mrf.mxu0
        %411 = vmatprep.mubr.bf16.mxu0 %v270
        %412 = vmatmul.mubr.bf16.gmra.mxu0 %v269
        %v413 = vpop.f32.mrf.mxu0
        %v414 = vadd.f32 %v248, %v413
        %v415 = vpop.f32.mrf.mxu0
        %v416 = vpop.f32.mrf.mxu0
        %v417 = vadd.f32 %v253, %v416
        %v418 = vpop.f32.mrf.mxu0
        %419 = vdwg.mxu0
        %vm420 = vcmask 523264
        %421 = vst.msk [vmem:[%s185] sm:$0xff] %vm420, %v406
        %422 = vst.msk [vmem:[%s185 + $0x8] sm:$0xff] %vm420, %v409
        %423 = vst.msk [vmem:[%s185 + $0x10] sm:$0xff] %vm420, %v414
        %424 = vst.msk [vmem:[%s185 + $0x18] sm:$0xff] %vm420, %v417
        %s425 = sand.u32 %s109, 1
        %s426 = scalar_lea.sflag [#allocation3], %s425
        %s427 = sand.u32 %s109, 1
        %s428 = smul.addr %s427, 32
        %s429 = scalar_lea.vmem [#allocation2], %s428
        // Predicated region
        $region33: #{tpu_custom_call.1} parent=31 // pred_check
          %p430 = pneg %p119
        $region34: #{tpu_custom_call.1} parent=31 // pred_check_branch
          %432 = sbr.rel (%p430) target = $region36
        $region35: #{tpu_custom_call.1} parent=31 // pred_region
          %s434 = ssub.s32 512, 512
          %435 = vsyncadd %s426, %s434
          %s436 = smul.addr %s21, 4
          %s437 = sadd.s32 %s22, %s436
          %s438 = smul.addr %s437, 128
          %s439 = scalar_lea.hbm %s3, %s438
          %s440 = sshll.u32 %s429, 4
          %s441 = int_to_ptr.vmem [resolvable:$true] %s440
          %446 = dma.vmem_to_hbm [thread:$0]  %s441, 512, %s439, %s426, 128, 128, 8
        $region36: #{tpu_custom_call.1} parent=31 // pred_fallthru
          _
      $region32: #{tpu_custom_call.1} parent=5 // pred_fallthru
        _
      %p447 = scmp.le.s32.totalorder 2, %s12
      // Predicated region
      $region37: #{tpu_custom_call.1} parent=5 // pred_check
        %p448 = pneg %p447
      $region38: #{tpu_custom_call.1} parent=5 // pred_check_branch
        %450 = sbr.rel (%p448) target = $region40
      $region39: #{tpu_custom_call.1} parent=5 // pred_region
        %s451 = ssub.s32 %s12, 2
        // Predicated region
        $region41: #{tpu_custom_call.1} parent=39 // pred_check
          %p452 = pneg %p125
        $region42: #{tpu_custom_call.1} parent=39 // pred_check_branch
          %454 = sbr.rel (%p452) target = $region44
        $region43: #{tpu_custom_call.1} parent=39 // pred_region
          %s455 = sand.u32 %s110, 1
          %s456 = scalar_lea.sflag [#allocation3], %s455
          %s457 = sand.u32 %s110, 1
          %s458 = smul.addr %s457, 32
          %s459 = scalar_lea.vmem [#allocation2], %s458
          %460 = dma.done %s456, 512
        $region44: #{tpu_custom_call.1} parent=39 // pred_fallthru
          _
      $region40: #{tpu_custom_call.1} parent=5 // pred_fallthru
        _
    $region6: #{tpu_custom_call.1} parent=1 // loop_footer
      %s16 = sadd.s32 1, %s12
    $region7: #{tpu_custom_call.1} parent=1 // loop_footer_branch
      %11 = sbr.rel target = $region3
    $region8: #{tpu_custom_call.1} parent=1 // loop_exit
      _
    %461 = vsyncpa [#allocation3], 1
    %s462 = scalar_lea.sflag [#allocation3], 1
    %463 = vsyncpa %s462, 1

</llo_original>
